<compile_context>
chip_gen: v5e
topology: v5e:2x2
jax: 0.10.0
libtpu: 0.0.40
codegen_flags: <defaults>
</compile_context>

<pallas_src>
from functools import partial

import jax
import jax.numpy as jnp
from jax import lax
from jax.experimental import pallas as pl
from jax.experimental.pallas import tpu as pltpu


def lstm_kernel(x_ref, w_ih_ref, w_hh_ref, b_ref, w_lin_ref, b_lin_ref,
                h0_ref, c0_ref, out_ref, *, hidden_size):
    """Full LSTM recurrence + final linear, all in VMEM.

    x_ref:     (seq_len, input_size)
    w_ih_ref:  (input_size, 4H)      w_hh_ref: (H, 4H)
    b_ref:     (1, 4H)               (= b_ih + b_hh)
    w_lin_ref: (O, H)                b_lin_ref: (O, 1)
    h0_ref/c0_ref: (1, H)            out_ref: (O, 1)
    """
    H = hidden_size
    seq_len = x_ref.shape[0]

    # ---- hoisted input projection: all timesteps at once, outside the serial chain ----
    if x_ref.shape[1] == 1:
        # input_size == 1: X @ W_ih is an outer product -> single VPU broadcast multiply.
        gates_x = x_ref[...] * w_ih_ref[0:1, :] + b_ref[...]          # (seq_len, 4H)
    else:
        gates_x = (jnp.dot(x_ref[...], w_ih_ref[...],
                           preferred_element_type=jnp.float32)
                   + b_ref[...])                                       # (seq_len, 4H)

    # bf16 weights for the recurrent matvec; accumulate in f32 on the MXU.
    w_hh_bf = w_hh_ref[...].astype(jnp.bfloat16)                       # (H, 4H)

    h = h0_ref[...]                                                    # (1, H) f32
    c = c0_ref[...]                                                    # (1, H) f32

    # ---- fully unrolled recurrence (seq_len is static and small) ----
    for t in range(seq_len):
        gates = gates_x[t:t + 1, :] + jnp.dot(
            h.astype(jnp.bfloat16), w_hh_bf,
            preferred_element_type=jnp.float32)                        # (1, 4H): i,f,g,o
        i_g = jax.nn.sigmoid(gates[:, 0:H])
        f_g = jax.nn.sigmoid(gates[:, H:2 * H])
        g_g = jnp.tanh(gates[:, 2 * H:3 * H])
        o_g = jax.nn.sigmoid(gates[:, 3 * H:4 * H])
        c = f_g * c + i_g * g_g
        h = o_g * jnp.tanh(c)

    # ---- epilogue: predictions[-1] == Linear(h_T), done on VPU/XLU (no MXU) ----
    # (1,H) * (O,H) -> (O,H), lane reduce -> (O,1)
    out_ref[...] = (jnp.sum(h * w_lin_ref[...], axis=-1, keepdims=True)
                    + b_lin_ref[...])


def lstm_forward(x, params):
    """x: (seq_len, input_size) f32 -> (output_size,) f32  (== predictions[-1])."""
    w_ih, w_hh, b, w_lin, b_lin, h0, c0 = params
    hidden_size = w_hh.shape[0]
    output_size = w_lin.shape[0]

    vmem = pl.BlockSpec(memory_space=pltpu.MemorySpace.VMEM)
    out = pl.pallas_call(
        partial(lstm_kernel, hidden_size=hidden_size),
        out_shape=jax.ShapeDtypeStruct((output_size, 1), jnp.float32),
        in_specs=[vmem] * 8,
        out_specs=vmem,
    )(x, w_ih, w_hh, b, w_lin, b_lin, h0, c0)
    return out[:, 0]


def lstm_reference(x, params):
    """Pure-JAX f32 reference matching torch.nn.LSTM + nn.Linear semantics."""
    w_ih, w_hh, b, w_lin, b_lin, h0, c0 = params
    H = w_hh.shape[0]

    def step(carry, x_t):
        h, c = carry
        gates = x_t[None, :] @ w_ih + h @ w_hh + b
        i_g = jax.nn.sigmoid(gates[:, 0:H])
        f_g = jax.nn.sigmoid(gates[:, H:2 * H])
        g_g = jnp.tanh(gates[:, 2 * H:3 * H])
        o_g = jax.nn.sigmoid(gates[:, 3 * H:4 * H])
        c_new = f_g * c + i_g * g_g
        h_new = o_g * jnp.tanh(c_new)
        return (h_new, c_new), h_new

    (h_last, _), _ = lax.scan(step, (h0, c0), x)
    return jnp.sum(h_last * w_lin, axis=-1) + b_lin[:, 0]   # (output_size,)


def init_params(key, input_size, hidden_size, output_size):
    """Deterministic init mirroring PyTorch's U(-1/sqrt(H), 1/sqrt(H))."""
    ks = jax.random.split(key, 6)
    bound = 1.0 / jnp.sqrt(jnp.asarray(hidden_size, jnp.float32))
    u = lambda k, shape: jax.random.uniform(k, shape, jnp.float32, -bound, bound)

    w_ih = u(ks[0], (input_size, 4 * hidden_size))        # weight_ih_l0, transposed
    w_hh = u(ks[1], (hidden_size, 4 * hidden_size))       # weight_hh_l0, transposed
    b_ih = u(ks[2], (1, 4 * hidden_size))
    b_hh = u(ks[3], (1, 4 * hidden_size))
    b = b_ih + b_hh                                       # LSTM adds both biases
    w_lin = u(ks[4], (output_size, hidden_size))          # linear.weight (O, H)
    b_lin = u(ks[5], (output_size, 1))                    # linear.bias as column
    h0 = jnp.zeros((1, hidden_size), jnp.float32)         # self.hidden_cell init
    c0 = jnp.zeros((1, hidden_size), jnp.float32)
    return (w_ih, w_hh, b, w_lin, b_lin, h0, c0)


if __name__ == "__main__":
    # Small shapes consistent with the module's forward:
    # input_seq of length 8, input_size=1, hidden=32 (4H=128 -> lane aligned), output=1.
    seq_len, input_size, hidden_size, output_size = 8, 1, 32, 1

    key = jax.random.PRNGKey(0)
    k_x, k_p = jax.random.split(key)
    x = jax.random.normal(k_x, (seq_len, input_size), jnp.float32)
    params = init_params(k_p, input_size, hidden_size, output_size)

    pred = jax.block_until_ready(lstm_forward(x, params))
    ref = jax.block_until_ready(lstm_reference(x, params))

    assert pred.shape == (output_size,)
    # Tolerance relaxed vs. pure-f32 because the recurrent matvec uses bf16 weights
    # (f32 accumulate); observed error is ~1e-3 class.
    assert jnp.allclose(pred, ref, atol=2e-2, rtol=2e-2), (pred, ref)
    print("KERNEL_OK")
</pallas_src>

<mosaic_0001>
module attributes {stable_mosaic.version = 11 : i64} {
  func.func @lstm_kernel(%arg0: memref<8x1xf32, #tpu.memory_space<vmem>>, %arg1: memref<1x128xf32, #tpu.memory_space<vmem>>, %arg2: memref<32x128xf32, #tpu.memory_space<vmem>>, %arg3: memref<1x128xf32, #tpu.memory_space<vmem>>, %arg4: memref<1x32xf32, #tpu.memory_space<vmem>>, %arg5: memref<1x1xf32, #tpu.memory_space<vmem>>, %arg6: memref<1x32xf32, #tpu.memory_space<vmem>>, %arg7: memref<1x32xf32, #tpu.memory_space<vmem>>, %arg8: memref<1x1xf32, #tpu.memory_space<vmem>>) attributes {dimension_semantics = [], scalar_prefetch = 0 : i64, scratch_operands = 0 : i64, tpu.core_type = #tpu.core_type<tc>} {
    %c0 = arith.constant 0 : index
    %c0_0 = arith.constant 0 : index
    %0 = vector.load %arg0[%c0, %c0_0] : memref<8x1xf32, #tpu.memory_space<vmem>>, vector<8x1xf32>
    %c0_1 = arith.constant 0 : index
    %c0_2 = arith.constant 0 : index
    %1 = vector.load %arg1[%c0_1, %c0_2] : memref<1x128xf32, #tpu.memory_space<vmem>>, vector<1x128xf32>
    %2 = vector.broadcast %0 : vector<8x1xf32> to vector<8x128xf32>
    %3 = vector.broadcast %1 : vector<1x128xf32> to vector<8x128xf32>
    %4 = arith.mulf %2, %3 : vector<8x128xf32>
    %c0_3 = arith.constant 0 : index
    %c0_4 = arith.constant 0 : index
    %5 = vector.load %arg3[%c0_3, %c0_4] : memref<1x128xf32, #tpu.memory_space<vmem>>, vector<1x128xf32>
    %6 = vector.broadcast %5 : vector<1x128xf32> to vector<8x128xf32>
    %7 = arith.addf %4, %6 : vector<8x128xf32>
    %c0_5 = arith.constant 0 : index
    %c0_6 = arith.constant 0 : index
    %8 = vector.load %arg2[%c0_5, %c0_6] : memref<32x128xf32, #tpu.memory_space<vmem>>, vector<32x128xf32>
    %9 = arith.truncf %8 : vector<32x128xf32> to vector<32x128xbf16>
    %c0_7 = arith.constant 0 : index
    %c0_8 = arith.constant 0 : index
    %10 = vector.load %arg6[%c0_7, %c0_8] : memref<1x32xf32, #tpu.memory_space<vmem>>, vector<1x32xf32>
    %c0_9 = arith.constant 0 : index
    %c0_10 = arith.constant 0 : index
    %11 = vector.load %arg7[%c0_9, %c0_10] : memref<1x32xf32, #tpu.memory_space<vmem>>, vector<1x32xf32>
    %12 = vector.extract_strided_slice %7 {offsets = [0, 0], sizes = [1, 128], strides = [1, 1]} : vector<8x128xf32> to vector<1x128xf32>
    %13 = arith.truncf %10 : vector<1x32xf32> to vector<1x32xbf16>
    %cst = arith.constant dense<0.000000e+00> : vector<1x128xf32>
    %14 = tpu.matmul %13, %9, %cst {dimension_numbers = #tpu.dot_dimension_numbers<[1], [0], [0], [1], [0, 0, 1, 1], [], []>} : vector<1x32xbf16>, vector<32x128xbf16>, vector<1x128xf32> -> vector<1x128xf32>
    %15 = arith.addf %12, %14 : vector<1x128xf32>
    %16 = vector.extract_strided_slice %15 {offsets = [0, 0], sizes = [1, 32], strides = [1, 1]} : vector<1x128xf32> to vector<1x32xf32>
    %17 = arith.negf %16 : vector<1x32xf32>
    %18 = math.exp %17 : vector<1x32xf32>
    %cst_11 = arith.constant 1.000000e+00 : f32
    %19 = vector.broadcast %cst_11 : f32 to vector<1x32xf32>
    %20 = arith.addf %19, %18 : vector<1x32xf32>
    %21 = arith.divf %19, %20 : vector<1x32xf32>
    %22 = vector.extract_strided_slice %15 {offsets = [0, 32], sizes = [1, 32], strides = [1, 1]} : vector<1x128xf32> to vector<1x32xf32>
    %23 = arith.negf %22 : vector<1x32xf32>
    %24 = math.exp %23 : vector<1x32xf32>
    %cst_12 = arith.constant 1.000000e+00 : f32
    %25 = vector.broadcast %cst_12 : f32 to vector<1x32xf32>
    %26 = arith.addf %25, %24 : vector<1x32xf32>
    %27 = arith.divf %25, %26 : vector<1x32xf32>
    %28 = vector.extract_strided_slice %15 {offsets = [0, 64], sizes = [1, 32], strides = [1, 1]} : vector<1x128xf32> to vector<1x32xf32>
    %29 = math.tanh %28 : vector<1x32xf32>
    %30 = vector.extract_strided_slice %15 {offsets = [0, 96], sizes = [1, 32], strides = [1, 1]} : vector<1x128xf32> to vector<1x32xf32>
    %31 = arith.negf %30 : vector<1x32xf32>
    %32 = math.exp %31 : vector<1x32xf32>
    %cst_13 = arith.constant 1.000000e+00 : f32
    %33 = vector.broadcast %cst_13 : f32 to vector<1x32xf32>
    %34 = arith.addf %33, %32 : vector<1x32xf32>
    %35 = arith.divf %33, %34 : vector<1x32xf32>
    %36 = arith.mulf %27, %11 : vector<1x32xf32>
    %37 = arith.mulf %21, %29 : vector<1x32xf32>
    %38 = arith.addf %36, %37 : vector<1x32xf32>
    %39 = math.tanh %38 : vector<1x32xf32>
    %40 = arith.mulf %35, %39 : vector<1x32xf32>
    %41 = vector.extract_strided_slice %7 {offsets = [1, 0], sizes = [1, 128], strides = [1, 1]} : vector<8x128xf32> to vector<1x128xf32>
    %42 = arith.truncf %40 : vector<1x32xf32> to vector<1x32xbf16>
    %cst_14 = arith.constant dense<0.000000e+00> : vector<1x128xf32>
    %43 = tpu.matmul %42, %9, %cst_14 {dimension_numbers = #tpu.dot_dimension_numbers<[1], [0], [0], [1], [0, 0, 1, 1], [], []>} : vector<1x32xbf16>, vector<32x128xbf16>, vector<1x128xf32> -> vector<1x128xf32>
    %44 = arith.addf %41, %43 : vector<1x128xf32>
    %45 = vector.extract_strided_slice %44 {offsets = [0, 0], sizes = [1, 32], strides = [1, 1]} : vector<1x128xf32> to vector<1x32xf32>
    %46 = arith.negf %45 : vector<1x32xf32>
    %47 = math.exp %46 : vector<1x32xf32>
    %cst_15 = arith.constant 1.000000e+00 : f32
    %48 = vector.broadcast %cst_15 : f32 to vector<1x32xf32>
    %49 = arith.addf %48, %47 : vector<1x32xf32>
    %50 = arith.divf %48, %49 : vector<1x32xf32>
    %51 = vector.extract_strided_slice %44 {offsets = [0, 32], sizes = [1, 32], strides = [1, 1]} : vector<1x128xf32> to vector<1x32xf32>
    %52 = arith.negf %51 : vector<1x32xf32>
    %53 = math.exp %52 : vector<1x32xf32>
    %cst_16 = arith.constant 1.000000e+00 : f32
    %54 = vector.broadcast %cst_16 : f32 to vector<1x32xf32>
    %55 = arith.addf %54, %53 : vector<1x32xf32>
    %56 = arith.divf %54, %55 : vector<1x32xf32>
    %57 = vector.extract_strided_slice %44 {offsets = [0, 64], sizes = [1, 32], strides = [1, 1]} : vector<1x128xf32> to vector<1x32xf32>
    %58 = math.tanh %57 : vector<1x32xf32>
    %59 = vector.extract_strided_slice %44 {offsets = [0, 96], sizes = [1, 32], strides = [1, 1]} : vector<1x128xf32> to vector<1x32xf32>
    %60 = arith.negf %59 : vector<1x32xf32>
    %61 = math.exp %60 : vector<1x32xf32>
    %cst_17 = arith.constant 1.000000e+00 : f32
    %62 = vector.broadcast %cst_17 : f32 to vector<1x32xf32>
    %63 = arith.addf %62, %61 : vector<1x32xf32>
    %64 = arith.divf %62, %63 : vector<1x32xf32>
    %65 = arith.mulf %56, %38 : vector<1x32xf32>
    %66 = arith.mulf %50, %58 : vector<1x32xf32>
    %67 = arith.addf %65, %66 : vector<1x32xf32>
    %68 = math.tanh %67 : vector<1x32xf32>
    %69 = arith.mulf %64, %68 : vector<1x32xf32>
    %70 = vector.extract_strided_slice %7 {offsets = [2, 0], sizes = [1, 128], strides = [1, 1]} : vector<8x128xf32> to vector<1x128xf32>
    %71 = arith.truncf %69 : vector<1x32xf32> to vector<1x32xbf16>
    %cst_18 = arith.constant dense<0.000000e+00> : vector<1x128xf32>
    %72 = tpu.matmul %71, %9, %cst_18 {dimension_numbers = #tpu.dot_dimension_numbers<[1], [0], [0], [1], [0, 0, 1, 1], [], []>} : vector<1x32xbf16>, vector<32x128xbf16>, vector<1x128xf32> -> vector<1x128xf32>
    %73 = arith.addf %70, %72 : vector<1x128xf32>
    %74 = vector.extract_strided_slice %73 {offsets = [0, 0], sizes = [1, 32], strides = [1, 1]} : vector<1x128xf32> to vector<1x32xf32>
    %75 = arith.negf %74 : vector<1x32xf32>
    %76 = math.exp %75 : vector<1x32xf32>
    %cst_19 = arith.constant 1.000000e+00 : f32
    %77 = vector.broadcast %cst_19 : f32 to vector<1x32xf32>
    %78 = arith.addf %77, %76 : vector<1x32xf32>
    %79 = arith.divf %77, %78 : vector<1x32xf32>
    %80 = vector.extract_strided_slice %73 {offsets = [0, 32], sizes = [1, 32], strides = [1, 1]} : vector<1x128xf32> to vector<1x32xf32>
    %81 = arith.negf %80 : vector<1x32xf32>
    %82 = math.exp %81 : vector<1x32xf32>
    %cst_20 = arith.constant 1.000000e+00 : f32
    %83 = vector.broadcast %cst_20 : f32 to vector<1x32xf32>
    %84 = arith.addf %83, %82 : vector<1x32xf32>
    %85 = arith.divf %83, %84 : vector<1x32xf32>
    %86 = vector.extract_strided_slice %73 {offsets = [0, 64], sizes = [1, 32], strides = [1, 1]} : vector<1x128xf32> to vector<1x32xf32>
    %87 = math.tanh %86 : vector<1x32xf32>
    %88 = vector.extract_strided_slice %73 {offsets = [0, 96], sizes = [1, 32], strides = [1, 1]} : vector<1x128xf32> to vector<1x32xf32>
    %89 = arith.negf %88 : vector<1x32xf32>
    %90 = math.exp %89 : vector<1x32xf32>
    %cst_21 = arith.constant 1.000000e+00 : f32
    %91 = vector.broadcast %cst_21 : f32 to vector<1x32xf32>
    %92 = arith.addf %91, %90 : vector<1x32xf32>
    %93 = arith.divf %91, %92 : vector<1x32xf32>
    %94 = arith.mulf %85, %67 : vector<1x32xf32>
    %95 = arith.mulf %79, %87 : vector<1x32xf32>
    %96 = arith.addf %94, %95 : vector<1x32xf32>
    %97 = math.tanh %96 : vector<1x32xf32>
    %98 = arith.mulf %93, %97 : vector<1x32xf32>
    %99 = vector.extract_strided_slice %7 {offsets = [3, 0], sizes = [1, 128], strides = [1, 1]} : vector<8x128xf32> to vector<1x128xf32>
    %100 = arith.truncf %98 : vector<1x32xf32> to vector<1x32xbf16>
    %cst_22 = arith.constant dense<0.000000e+00> : vector<1x128xf32>
    %101 = tpu.matmul %100, %9, %cst_22 {dimension_numbers = #tpu.dot_dimension_numbers<[1], [0], [0], [1], [0, 0, 1, 1], [], []>} : vector<1x32xbf16>, vector<32x128xbf16>, vector<1x128xf32> -> vector<1x128xf32>
    %102 = arith.addf %99, %101 : vector<1x128xf32>
    %103 = vector.extract_strided_slice %102 {offsets = [0, 0], sizes = [1, 32], strides = [1, 1]} : vector<1x128xf32> to vector<1x32xf32>
    %104 = arith.negf %103 : vector<1x32xf32>
    %105 = math.exp %104 : vector<1x32xf32>
    %cst_23 = arith.constant 1.000000e+00 : f32
    %106 = vector.broadcast %cst_23 : f32 to vector<1x32xf32>
    %107 = arith.addf %106, %105 : vector<1x32xf32>
    %108 = arith.divf %106, %107 : vector<1x32xf32>
    %109 = vector.extract_strided_slice %102 {offsets = [0, 32], sizes = [1, 32], strides = [1, 1]} : vector<1x128xf32> to vector<1x32xf32>
    %110 = arith.negf %109 : vector<1x32xf32>
    %111 = math.exp %110 : vector<1x32xf32>
    %cst_24 = arith.constant 1.000000e+00 : f32
    %112 = vector.broadcast %cst_24 : f32 to vector<1x32xf32>
    %113 = arith.addf %112, %111 : vector<1x32xf32>
    %114 = arith.divf %112, %113 : vector<1x32xf32>
    %115 = vector.extract_strided_slice %102 {offsets = [0, 64], sizes = [1, 32], strides = [1, 1]} : vector<1x128xf32> to vector<1x32xf32>
    %116 = math.tanh %115 : vector<1x32xf32>
    %117 = vector.extract_strided_slice %102 {offsets = [0, 96], sizes = [1, 32], strides = [1, 1]} : vector<1x128xf32> to vector<1x32xf32>
    %118 = arith.negf %117 : vector<1x32xf32>
    %119 = math.exp %118 : vector<1x32xf32>
    %cst_25 = arith.constant 1.000000e+00 : f32
    %120 = vector.broadcast %cst_25 : f32 to vector<1x32xf32>
    %121 = arith.addf %120, %119 : vector<1x32xf32>
    %122 = arith.divf %120, %121 : vector<1x32xf32>
    %123 = arith.mulf %114, %96 : vector<1x32xf32>
    %124 = arith.mulf %108, %116 : vector<1x32xf32>
    %125 = arith.addf %123, %124 : vector<1x32xf32>
    %126 = math.tanh %125 : vector<1x32xf32>
    %127 = arith.mulf %122, %126 : vector<1x32xf32>
    %128 = vector.extract_strided_slice %7 {offsets = [4, 0], sizes = [1, 128], strides = [1, 1]} : vector<8x128xf32> to vector<1x128xf32>
    %129 = arith.truncf %127 : vector<1x32xf32> to vector<1x32xbf16>
    %cst_26 = arith.constant dense<0.000000e+00> : vector<1x128xf32>
    %130 = tpu.matmul %129, %9, %cst_26 {dimension_numbers = #tpu.dot_dimension_numbers<[1], [0], [0], [1], [0, 0, 1, 1], [], []>} : vector<1x32xbf16>, vector<32x128xbf16>, vector<1x128xf32> -> vector<1x128xf32>
    %131 = arith.addf %128, %130 : vector<1x128xf32>
    %132 = vector.extract_strided_slice %131 {offsets = [0, 0], sizes = [1, 32], strides = [1, 1]} : vector<1x128xf32> to vector<1x32xf32>
    %133 = arith.negf %132 : vector<1x32xf32>
    %134 = math.exp %133 : vector<1x32xf32>
    %cst_27 = arith.constant 1.000000e+00 : f32
    %135 = vector.broadcast %cst_27 : f32 to vector<1x32xf32>
    %136 = arith.addf %135, %134 : vector<1x32xf32>
    %137 = arith.divf %135, %136 : vector<1x32xf32>
    %138 = vector.extract_strided_slice %131 {offsets = [0, 32], sizes = [1, 32], strides = [1, 1]} : vector<1x128xf32> to vector<1x32xf32>
    %139 = arith.negf %138 : vector<1x32xf32>
    %140 = math.exp %139 : vector<1x32xf32>
    %cst_28 = arith.constant 1.000000e+00 : f32
    %141 = vector.broadcast %cst_28 : f32 to vector<1x32xf32>
    %142 = arith.addf %141, %140 : vector<1x32xf32>
    %143 = arith.divf %141, %142 : vector<1x32xf32>
    %144 = vector.extract_strided_slice %131 {offsets = [0, 64], sizes = [1, 32], strides = [1, 1]} : vector<1x128xf32> to vector<1x32xf32>
    %145 = math.tanh %144 : vector<1x32xf32>
    %146 = vector.extract_strided_slice %131 {offsets = [0, 96], sizes = [1, 32], strides = [1, 1]} : vector<1x128xf32> to vector<1x32xf32>
    %147 = arith.negf %146 : vector<1x32xf32>
    %148 = math.exp %147 : vector<1x32xf32>
    %cst_29 = arith.constant 1.000000e+00 : f32
    %149 = vector.broadcast %cst_29 : f32 to vector<1x32xf32>
    %150 = arith.addf %149, %148 : vector<1x32xf32>
    %151 = arith.divf %149, %150 : vector<1x32xf32>
    %152 = arith.mulf %143, %125 : vector<1x32xf32>
    %153 = arith.mulf %137, %145 : vector<1x32xf32>
    %154 = arith.addf %152, %153 : vector<1x32xf32>
    %155 = math.tanh %154 : vector<1x32xf32>
    %156 = arith.mulf %151, %155 : vector<1x32xf32>
    %157 = vector.extract_strided_slice %7 {offsets = [5, 0], sizes = [1, 128], strides = [1, 1]} : vector<8x128xf32> to vector<1x128xf32>
    %158 = arith.truncf %156 : vector<1x32xf32> to vector<1x32xbf16>
    %cst_30 = arith.constant dense<0.000000e+00> : vector<1x128xf32>
    %159 = tpu.matmul %158, %9, %cst_30 {dimension_numbers = #tpu.dot_dimension_numbers<[1], [0], [0], [1], [0, 0, 1, 1], [], []>} : vector<1x32xbf16>, vector<32x128xbf16>, vector<1x128xf32> -> vector<1x128xf32>
    %160 = arith.addf %157, %159 : vector<1x128xf32>
    %161 = vector.extract_strided_slice %160 {offsets = [0, 0], sizes = [1, 32], strides = [1, 1]} : vector<1x128xf32> to vector<1x32xf32>
    %162 = arith.negf %161 : vector<1x32xf32>
    %163 = math.exp %162 : vector<1x32xf32>
    %cst_31 = arith.constant 1.000000e+00 : f32
    %164 = vector.broadcast %cst_31 : f32 to vector<1x32xf32>
    %165 = arith.addf %164, %163 : vector<1x32xf32>
    %166 = arith.divf %164, %165 : vector<1x32xf32>
    %167 = vector.extract_strided_slice %160 {offsets = [0, 32], sizes = [1, 32], strides = [1, 1]} : vector<1x128xf32> to vector<1x32xf32>
    %168 = arith.negf %167 : vector<1x32xf32>
    %169 = math.exp %168 : vector<1x32xf32>
    %cst_32 = arith.constant 1.000000e+00 : f32
    %170 = vector.broadcast %cst_32 : f32 to vector<1x32xf32>
    %171 = arith.addf %170, %169 : vector<1x32xf32>
    %172 = arith.divf %170, %171 : vector<1x32xf32>
    %173 = vector.extract_strided_slice %160 {offsets = [0, 64], sizes = [1, 32], strides = [1, 1]} : vector<1x128xf32> to vector<1x32xf32>
    %174 = math.tanh %173 : vector<1x32xf32>
    %175 = vector.extract_strided_slice %160 {offsets = [0, 96], sizes = [1, 32], strides = [1, 1]} : vector<1x128xf32> to vector<1x32xf32>
    %176 = arith.negf %175 : vector<1x32xf32>
    %177 = math.exp %176 : vector<1x32xf32>
    %cst_33 = arith.constant 1.000000e+00 : f32
    %178 = vector.broadcast %cst_33 : f32 to vector<1x32xf32>
    %179 = arith.addf %178, %177 : vector<1x32xf32>
    %180 = arith.divf %178, %179 : vector<1x32xf32>
    %181 = arith.mulf %172, %154 : vector<1x32xf32>
    %182 = arith.mulf %166, %174 : vector<1x32xf32>
    %183 = arith.addf %181, %182 : vector<1x32xf32>
    %184 = math.tanh %183 : vector<1x32xf32>
    %185 = arith.mulf %180, %184 : vector<1x32xf32>
    %186 = vector.extract_strided_slice %7 {offsets = [6, 0], sizes = [1, 128], strides = [1, 1]} : vector<8x128xf32> to vector<1x128xf32>
    %187 = arith.truncf %185 : vector<1x32xf32> to vector<1x32xbf16>
    %cst_34 = arith.constant dense<0.000000e+00> : vector<1x128xf32>
    %188 = tpu.matmul %187, %9, %cst_34 {dimension_numbers = #tpu.dot_dimension_numbers<[1], [0], [0], [1], [0, 0, 1, 1], [], []>} : vector<1x32xbf16>, vector<32x128xbf16>, vector<1x128xf32> -> vector<1x128xf32>
    %189 = arith.addf %186, %188 : vector<1x128xf32>
    %190 = vector.extract_strided_slice %189 {offsets = [0, 0], sizes = [1, 32], strides = [1, 1]} : vector<1x128xf32> to vector<1x32xf32>
    %191 = arith.negf %190 : vector<1x32xf32>
    %192 = math.exp %191 : vector<1x32xf32>
    %cst_35 = arith.constant 1.000000e+00 : f32
    %193 = vector.broadcast %cst_35 : f32 to vector<1x32xf32>
    %194 = arith.addf %193, %192 : vector<1x32xf32>
    %195 = arith.divf %193, %194 : vector<1x32xf32>
    %196 = vector.extract_strided_slice %189 {offsets = [0, 32], sizes = [1, 32], strides = [1, 1]} : vector<1x128xf32> to vector<1x32xf32>
    %197 = arith.negf %196 : vector<1x32xf32>
    %198 = math.exp %197 : vector<1x32xf32>
    %cst_36 = arith.constant 1.000000e+00 : f32
    %199 = vector.broadcast %cst_36 : f32 to vector<1x32xf32>
    %200 = arith.addf %199, %198 : vector<1x32xf32>
    %201 = arith.divf %199, %200 : vector<1x32xf32>
    %202 = vector.extract_strided_slice %189 {offsets = [0, 64], sizes = [1, 32], strides = [1, 1]} : vector<1x128xf32> to vector<1x32xf32>
    %203 = math.tanh %202 : vector<1x32xf32>
    %204 = vector.extract_strided_slice %189 {offsets = [0, 96], sizes = [1, 32], strides = [1, 1]} : vector<1x128xf32> to vector<1x32xf32>
    %205 = arith.negf %204 : vector<1x32xf32>
    %206 = math.exp %205 : vector<1x32xf32>
    %cst_37 = arith.constant 1.000000e+00 : f32
    %207 = vector.broadcast %cst_37 : f32 to vector<1x32xf32>
    %208 = arith.addf %207, %206 : vector<1x32xf32>
    %209 = arith.divf %207, %208 : vector<1x32xf32>
    %210 = arith.mulf %201, %183 : vector<1x32xf32>
    %211 = arith.mulf %195, %203 : vector<1x32xf32>
    %212 = arith.addf %210, %211 : vector<1x32xf32>
    %213 = math.tanh %212 : vector<1x32xf32>
    %214 = arith.mulf %209, %213 : vector<1x32xf32>
    %215 = vector.extract_strided_slice %7 {offsets = [7, 0], sizes = [1, 128], strides = [1, 1]} : vector<8x128xf32> to vector<1x128xf32>
    %216 = arith.truncf %214 : vector<1x32xf32> to vector<1x32xbf16>
    %cst_38 = arith.constant dense<0.000000e+00> : vector<1x128xf32>
    %217 = tpu.matmul %216, %9, %cst_38 {dimension_numbers = #tpu.dot_dimension_numbers<[1], [0], [0], [1], [0, 0, 1, 1], [], []>} : vector<1x32xbf16>, vector<32x128xbf16>, vector<1x128xf32> -> vector<1x128xf32>
    %218 = arith.addf %215, %217 : vector<1x128xf32>
    %219 = vector.extract_strided_slice %218 {offsets = [0, 0], sizes = [1, 32], strides = [1, 1]} : vector<1x128xf32> to vector<1x32xf32>
    %220 = arith.negf %219 : vector<1x32xf32>
    %221 = math.exp %220 : vector<1x32xf32>
    %cst_39 = arith.constant 1.000000e+00 : f32
    %222 = vector.broadcast %cst_39 : f32 to vector<1x32xf32>
    %223 = arith.addf %222, %221 : vector<1x32xf32>
    %224 = arith.divf %222, %223 : vector<1x32xf32>
    %225 = vector.extract_strided_slice %218 {offsets = [0, 32], sizes = [1, 32], strides = [1, 1]} : vector<1x128xf32> to vector<1x32xf32>
    %226 = arith.negf %225 : vector<1x32xf32>
    %227 = math.exp %226 : vector<1x32xf32>
    %cst_40 = arith.constant 1.000000e+00 : f32
    %228 = vector.broadcast %cst_40 : f32 to vector<1x32xf32>
    %229 = arith.addf %228, %227 : vector<1x32xf32>
    %230 = arith.divf %228, %229 : vector<1x32xf32>
    %231 = vector.extract_strided_slice %218 {offsets = [0, 64], sizes = [1, 32], strides = [1, 1]} : vector<1x128xf32> to vector<1x32xf32>
    %232 = math.tanh %231 : vector<1x32xf32>
    %233 = vector.extract_strided_slice %218 {offsets = [0, 96], sizes = [1, 32], strides = [1, 1]} : vector<1x128xf32> to vector<1x32xf32>
    %234 = arith.negf %233 : vector<1x32xf32>
    %235 = math.exp %234 : vector<1x32xf32>
    %cst_41 = arith.constant 1.000000e+00 : f32
    %236 = vector.broadcast %cst_41 : f32 to vector<1x32xf32>
    %237 = arith.addf %236, %235 : vector<1x32xf32>
    %238 = arith.divf %236, %237 : vector<1x32xf32>
    %239 = arith.mulf %230, %212 : vector<1x32xf32>
    %240 = arith.mulf %224, %232 : vector<1x32xf32>
    %241 = arith.addf %239, %240 : vector<1x32xf32>
    %242 = math.tanh %241 : vector<1x32xf32>
    %243 = arith.mulf %238, %242 : vector<1x32xf32>
    %c0_42 = arith.constant 0 : index
    %c0_43 = arith.constant 0 : index
    %244 = vector.load %arg4[%c0_42, %c0_43] : memref<1x32xf32, #tpu.memory_space<vmem>>, vector<1x32xf32>
    %245 = arith.mulf %243, %244 : vector<1x32xf32>
    %cst_44 = arith.constant dense<0.000000e+00> : vector<1xf32>
    %246 = vector.multi_reduction <add>, %245, %cst_44 [1] : vector<1x32xf32> to vector<1xf32>
    %247 = vector.shape_cast %246 : vector<1xf32> to vector<1x1xf32>
    %c0_45 = arith.constant 0 : index
    %c0_46 = arith.constant 0 : index
    %248 = vector.load %arg5[%c0_45, %c0_46] : memref<1x1xf32, #tpu.memory_space<vmem>>, vector<1x1xf32>
    %249 = arith.addf %247, %248 : vector<1x1xf32>
    %c0_47 = arith.constant 0 : index
    %c0_48 = arith.constant 0 : index
    %250 = vector.load %arg8[%c0_47, %c0_48] : memref<1x1xf32, #tpu.memory_space<vmem>>, vector<1x1xf32>
    tpu.vector_store %arg8[%c0_47, %c0_48], %249 {strides = array<i32>} : memref<1x1xf32, #tpu.memory_space<vmem>>, vector<1x1xf32>,
    return
  }
}

</mosaic_0001>

<llo_original>
// kernel: tpu_custom_call.1
$region0: #{tpu_custom_call.1}
  #allocation0 [shape = 'u32[]', space=smem, size = 0x4, offset = 0x4, fixed_abs, tag = 'smem constant byte address 0x4 - core index']
  #allocation1 [shape = 'u32[72,128]{1,0:T(1,128)}', space=vmem, size = 0x9000, scoped, tag = 'internal scratch']
  #allocation2 [shape = 'f32[1,1]{1,0:T(1,128)S(1)}', space=vmem, size = 0x200, scoped, tag = 'scoped memory for tpu_custom_call.1']
  %s0 = inlined_call_operand.vmem [shape: f32[8,1], index: 0, kind: input, shape index: {}]
  %s1 = inlined_call_operand.vmem [shape: f32[1,128], index: 1, kind: input, shape index: {}]
  %s2 = inlined_call_operand.hbm [shape: f32[32,128], index: 2, kind: input, shape index: {}]
  %s3 = inlined_call_operand.vmem [shape: f32[1,128], index: 3, kind: input, shape index: {}]
  %s4 = inlined_call_operand.vmem [shape: f32[1,32], index: 4, kind: input, shape index: {}]
  %s5 = inlined_call_operand.<no memory space> [shape: f32[1,1], index: 5, kind: input, shape index: {}]
  %s6 = inlined_call_operand.vmem [shape: f32[1,32], index: 6, kind: input, shape index: {}]
  %s7 = inlined_call_operand.vmem [shape: f32[1,32], index: 7, kind: input, shape index: {}]
  %s8 = inlined_call_operand.hbm [shape: f32[1,1], index: 8, kind: output, shape index: {}]
  %s9 = sld [smem:[#allocation0]]
  $region46: #{tpu_custom_call.1} parent=0
    _
  %s11 = ssub.s32 1, %s9
  %s12 = scalar_select 0, %s11, %s9
  %v13 = vstv %s5
  %14 = vst [vmem:[#allocation2] sm:$0x1] %v13
  $region1: #{tpu_custom_call.1} parent=0
    #allocation3 [shape = 'u8[16384]{0}', space=vmem, size = 0x4000, scoped, tag = 'input window, operand 2, single buffered']
    #allocation4 [shape = 's32[1]{0}', space=sflag, size = 0x4, scoped, tag = 'scoped memory for tpu_custom_call.1']
    #allocation5 [shape = 's32[1]{0}', space=sflag, size = 0x4, scoped, tag = 'scoped memory for tpu_custom_call.1']
    #allocation6 [shape = 'u8[512]{0}', space=vmem, size = 0x400, scoped, tag = 'output window, operand 0, single buffered']
    %15 = vsyncpa [#allocation4], 0
    %16 = vsyncpa [#allocation5], 0
    // Predicated region
    $region2: #{tpu_custom_call.1} parent=1 // pred_check
      _
    $region3: #{tpu_custom_call.1} parent=1 // pred_check_branch
      %18 = sbr.rel (0) target = $region5
    $region4: #{tpu_custom_call.1} parent=1 // pred_region
      _
    $region5: #{tpu_custom_call.1} parent=1 // pred_fallthru
      _
    // Predicated region
    $region6: #{tpu_custom_call.1} parent=1 // pred_check
      _
    $region7: #{tpu_custom_call.1} parent=1 // pred_check_branch
      %20 = sbr.rel (0) target = $region9
    $region8: #{tpu_custom_call.1} parent=1 // pred_region
      _
    $region9: #{tpu_custom_call.1} parent=1 // pred_fallthru
      _
    // Predicated region
    $region10: #{tpu_custom_call.1} parent=1 // pred_check
      _
    $region11: #{tpu_custom_call.1} parent=1 // pred_check_branch
      %22 = sbr.rel (0) target = $region13
    $region12: #{tpu_custom_call.1} parent=1 // pred_region
      %24 = vsyncadd [#allocation4], 0
      %s25 = sshll.u32 %s2, 4
      %s26 = int_to_ptr.hbm [resolvable:$true] %s25
      %s27 = sshll.u32 [#allocation3], 4
      %s28 = int_to_ptr.vmem [resolvable:$true] %s27
      %33 = dma.hbm_to_vmem [thread:$0]  %s26, 512, %s28, [#allocation4], 128, 128, 8
    $region13: #{tpu_custom_call.1} parent=1 // pred_fallthru
      _
    // Predicated region
    $region14: #{tpu_custom_call.1} parent=1 // pred_check
      _
    $region15: #{tpu_custom_call.1} parent=1 // pred_check_branch
      %35 = sbr.rel (0) target = $region17
    $region16: #{tpu_custom_call.1} parent=1 // pred_region
      _
    $region17: #{tpu_custom_call.1} parent=1 // pred_fallthru
      _
    // Predicated region
    $region18: #{tpu_custom_call.1} parent=1 // pred_check
      _
    $region19: #{tpu_custom_call.1} parent=1 // pred_check_branch
      %37 = sbr.rel (0) target = $region21
    $region20: #{tpu_custom_call.1} parent=1 // pred_region
      _
    $region21: #{tpu_custom_call.1} parent=1 // pred_fallthru
      _
    // Predicated region
    $region22: #{tpu_custom_call.1} parent=1 // pred_check
      _
    $region23: #{tpu_custom_call.1} parent=1 // pred_check_branch
      %39 = sbr.rel (0) target = $region25
    $region24: #{tpu_custom_call.1} parent=1 // pred_region
      _
    $region25: #{tpu_custom_call.1} parent=1 // pred_fallthru
      _
    // Predicated region
    $region26: #{tpu_custom_call.1} parent=1 // pred_check
      _
    $region27: #{tpu_custom_call.1} parent=1 // pred_check_branch
      %41 = sbr.rel (0) target = $region29
    $region28: #{tpu_custom_call.1} parent=1 // pred_region
      _
    $region29: #{tpu_custom_call.1} parent=1 // pred_fallthru
      _
    // Predicated region
    $region30: #{tpu_custom_call.1} parent=1 // pred_check
      _
    $region31: #{tpu_custom_call.1} parent=1 // pred_check_branch
      %43 = sbr.rel (0) target = $region33
    $region32: #{tpu_custom_call.1} parent=1 // pred_region
      _
    $region33: #{tpu_custom_call.1} parent=1 // pred_fallthru
      _
    // Predicated region
    $region34: #{tpu_custom_call.1} parent=1 // pred_check
      _
    $region35: #{tpu_custom_call.1} parent=1 // pred_check_branch
      %45 = sbr.rel (0) target = $region37
    $region36: #{tpu_custom_call.1} parent=1 // pred_region
      %47 = dma.done [#allocation4], 512
    $region37: #{tpu_custom_call.1} parent=1 // pred_fallthru
      _
    %v49 = vld [vmem:[%s0] sm:$0xff]
    %v50 = vld [vmem:[%s1] sm:$0x1]
    %52 = vset.pattern.permute.xlu0 0
    %53 = vperm.xlu0 %52, %v49
    %v54 = vpop.permute.xlu0 %53
    %v57 = vperm.slane %v50, 0
    %v59 = vmul.f32 %v54, %v57
    %v60 = vld [vmem:[%s3] sm:$0x1]
    %v62 = vperm.slane %v60, 0
    %v64 = vadd.f32 %v59, %v62
    %v65 = vld [vmem:[#allocation3] sm:$0xff]
    %v66 = vld [vmem:[#allocation3 + $0x8] sm:$0xff]
    %v67 = vld [vmem:[#allocation3 + $0x10] sm:$0xff]
    %v68 = vld [vmem:[#allocation3 + $0x18] sm:$0xff]
    %v69 = vpack.c.bf16 %v66, %v65
    %v70 = vpack.c.bf16 %v68, %v67
    %v71 = vld [vmem:[%s6] sm:$0x1]
    %v72 = vld [vmem:[%s7] sm:$0x1]
    %v73 = vpack.c.bf16 %v71, %v71
    %vm74 = vcmask 261120
    %v76 = vsel %vm74, %v73, 0
    %78 = vmatpush.bf16.msra.mxu0 0
    %79 = vmatpush.bf16.msra.mxu0 0
    %80 = vmatpush.bf16.msra.mxu0 0
    %81 = vmatpush.bf16.msra.mxu0 0
    %82 = vmatpush.bf16.msra.mxu0 0
    %83 = vmatpush.bf16.msra.mxu0 0
    %84 = vmatpush.bf16.msra.mxu0 %v70
    %85 = vmatpush.bf16.msra.mxu0 %v69
    %86 = vmatmul.bf16.gmra.mxu0 %v76
    %v87 = vpop.f32.mrf.mxu0
    %v88 = vadd.f32 0.0, %v87
    %v89 = vpop.f32.mrf.mxu0
    %90 = vdwg.mxu0
    %v91 = vadd.f32 %v64, %v88
    %v92 = vxor.u32 %v91, 2147483648
    %v93 = vmul.f32 %v92, 1.442695
    %v94 = vpow.pop %v93
    %v95 = vadd.f32 %v94, 1.0
    %v96 = vrcp.pop %v95
    %v97 = vmul.f32 %v95, %v96
    %v98 = vsub.f32 1.0, %v97
    %v99 = vmul.f32 %v96, %v98
    %v100 = vadd.f32 %v96, %v99
    %vm101 = vweird.f32 %v95
    %vm102 = vweird.f32 %v96
    %vm103 = vmor %vm101, %vm102
    %v104 = vsel %vm103, %v96, %v100
    %v105 = vand.u32 2147483647, %v95
    %vm106 = vcmp.eq.f32.partialorder %v105, 8.507059e+37
    %v107 = vand.u32 %v95, 2147483648
    %v108 = vor.u32 1.1754944e-38, %v107
    %v109 = vsel %vm106, %v108, %v104
    %v110 = vmul.f32 1.0, %v109
    %v111 = vtanh.pop %v91
    %v113 = vperm.slane %v72, 0
    %114 = vrot.lane.b32.xlu0 %v113, 32
    %v115 = vpop.permute.xlu0 %114
    %v117 = vmul.f32 %v110, %v115
    %119 = vrot.lane.b32.xlu0 %v111, 64
    %v120 = vpop.permute.xlu0 %119
    %v122 = vmul.f32 %v110, %v120
    %124 = vrot.lane.b32.xlu0 %v122, 32
    %v125 = vpop.permute.xlu0 %124
    %v127 = vadd.f32 %v117, %v125
    %v128 = vtanh.pop %v127
    %130 = vrot.lane.b32.xlu0 %v128, 64
    %v131 = vpop.permute.xlu0 %130
    %v133 = vmul.f32 %v110, %v131
    %v134 = vpack.c.bf16 %v133, %v133
    %136 = vrot.lane.b32.xlu0 %v134, 32
    %v137 = vpop.permute.xlu0 %136
    %v139 = vsel %vm74, %v137, 0
    %141 = vmatpush.bf16.msra.mxu0 0
    %142 = vmatpush.bf16.msra.mxu0 0
    %143 = vmatpush.bf16.msra.mxu0 0
    %144 = vmatpush.bf16.msra.mxu0 0
    %145 = vmatpush.bf16.msra.mxu0 0
    %146 = vmatpush.bf16.msra.mxu0 0
    %147 = vmatpush.bf16.msra.mxu0 %v70
    %148 = vmatpush.bf16.msra.mxu0 %v69
    %149 = vmatmul.bf16.gmra.mxu0 %v139
    %v150 = vpop.f32.mrf.mxu0
    %v151 = vadd.f32 0.0, %v150
    %v152 = vpop.f32.mrf.mxu0
    %153 = vdwg.mxu0
    %v155 = vrot.slane %v151, 7
    %v157 = vadd.f32 %v64, %v155
    %v158 = vxor.u32 %v157, 2147483648
    %v159 = vmul.f32 %v158, 1.442695
    %v160 = vpow.pop %v159
    %v161 = vadd.f32 %v160, 1.0
    %v162 = vrcp.pop %v161
    %v163 = vmul.f32 %v161, %v162
    %v164 = vsub.f32 1.0, %v163
    %v165 = vmul.f32 %v162, %v164
    %v166 = vadd.f32 %v162, %v165
    %vm167 = vweird.f32 %v161
    %vm168 = vweird.f32 %v162
    %vm169 = vmor %vm167, %vm168
    %v170 = vsel %vm169, %v162, %v166
    %v171 = vand.u32 2147483647, %v161
    %vm172 = vcmp.eq.f32.partialorder %v171, 8.507059e+37
    %v173 = vand.u32 %v161, 2147483648
    %v174 = vor.u32 1.1754944e-38, %v173
    %v175 = vsel %vm172, %v174, %v170
    %v176 = vmul.f32 1.0, %v175
    %v177 = vtanh.pop %v157
    %v179 = vrot.slane %v127, 7
    %v181 = vmul.f32 %v176, %v179
    %183 = vrot.lane.b32.xlu0 %v177, 64
    %v184 = vpop.permute.xlu0 %183
    %v186 = vmul.f32 %v176, %v184
    %188 = vrot.lane.b32.xlu0 %v186, 32
    %v189 = vpop.permute.xlu0 %188
    %v191 = vadd.f32 %v181, %v189
    %v192 = vtanh.pop %v191
    %194 = vrot.lane.b32.xlu0 %v192, 64
    %v195 = vpop.permute.xlu0 %194
    %v197 = vmul.f32 %v176, %v195
    %v198 = vpack.c.bf16 %v197, %v197
    %v200 = vshrl.u32 %v198, 16
    %202 = vrot.lane.b32.xlu0 %v200, 32
    %v203 = vpop.permute.xlu0 %202
    %v205 = vsel %vm74, %v203, 0
    %207 = vmatpush.bf16.msra.mxu0 0
    %208 = vmatpush.bf16.msra.mxu0 0
    %209 = vmatpush.bf16.msra.mxu0 0
    %210 = vmatpush.bf16.msra.mxu0 0
    %211 = vmatpush.bf16.msra.mxu0 0
    %212 = vmatpush.bf16.msra.mxu0 0
    %213 = vmatpush.bf16.msra.mxu0 %v70
    %214 = vmatpush.bf16.msra.mxu0 %v69
    %215 = vmatmul.bf16.gmra.mxu0 %v205
    %v216 = vpop.f32.mrf.mxu0
    %v217 = vadd.f32 0.0, %v216
    %v218 = vpop.f32.mrf.mxu0
    %219 = vdwg.mxu0
    %v221 = vrot.slane %v217, 6
    %v223 = vadd.f32 %v64, %v221
    %v224 = vxor.u32 %v223, 2147483648
    %v225 = vmul.f32 %v224, 1.442695
    %v226 = vpow.pop %v225
    %v227 = vadd.f32 %v226, 1.0
    %v228 = vrcp.pop %v227
    %v229 = vmul.f32 %v227, %v228
    %v230 = vsub.f32 1.0, %v229
    %v231 = vmul.f32 %v228, %v230
    %v232 = vadd.f32 %v228, %v231
    %vm233 = vweird.f32 %v227
    %vm234 = vweird.f32 %v228
    %vm235 = vmor %vm233, %vm234
    %v236 = vsel %vm235, %v228, %v232
    %v237 = vand.u32 2147483647, %v227
    %vm238 = vcmp.eq.f32.partialorder %v237, 8.507059e+37
    %v239 = vand.u32 %v227, 2147483648
    %v240 = vor.u32 1.1754944e-38, %v239
    %v241 = vsel %vm238, %v240, %v236
    %v242 = vmul.f32 1.0, %v241
    %v243 = vtanh.pop %v223
    %v245 = vrot.slane %v191, 7
    %v247 = vmul.f32 %v242, %v245
    %249 = vrot.lane.b32.xlu0 %v243, 64
    %v250 = vpop.permute.xlu0 %249
    %v252 = vmul.f32 %v242, %v250
    %254 = vrot.lane.b32.xlu0 %v252, 32
    %v255 = vpop.permute.xlu0 %254
    %v257 = vadd.f32 %v247, %v255
    %v258 = vtanh.pop %v257
    %260 = vrot.lane.b32.xlu0 %v258, 64
    %v261 = vpop.permute.xlu0 %260
    %v263 = vmul.f32 %v242, %v261
    %v264 = vpack.c.bf16 %v263, %v263
    %v266 = vrot.slane %v264, 1
    %267 = vrot.lane.b32.xlu0 %v266, 32
    %v268 = vpop.permute.xlu0 %267
    %v270 = vsel %vm74, %v268, 0
    %272 = vmatpush.bf16.msra.mxu0 0
    %273 = vmatpush.bf16.msra.mxu0 0
    %274 = vmatpush.bf16.msra.mxu0 0
    %275 = vmatpush.bf16.msra.mxu0 0
    %276 = vmatpush.bf16.msra.mxu0 0
    %277 = vmatpush.bf16.msra.mxu0 0
    %278 = vmatpush.bf16.msra.mxu0 %v70
    %279 = vmatpush.bf16.msra.mxu0 %v69
    %280 = vmatmul.bf16.gmra.mxu0 %v270
    %v281 = vpop.f32.mrf.mxu0
    %v282 = vadd.f32 0.0, %v281
    %v283 = vpop.f32.mrf.mxu0
    %284 = vdwg.mxu0
    %v286 = vrot.slane %v282, 5
    %v288 = vadd.f32 %v64, %v286
    %v289 = vxor.u32 %v288, 2147483648
    %v290 = vmul.f32 %v289, 1.442695
    %v291 = vpow.pop %v290
    %v292 = vadd.f32 %v291, 1.0
    %v293 = vrcp.pop %v292
    %v294 = vmul.f32 %v292, %v293
    %v295 = vsub.f32 1.0, %v294
    %v296 = vmul.f32 %v293, %v295
    %v297 = vadd.f32 %v293, %v296
    %vm298 = vweird.f32 %v292
    %vm299 = vweird.f32 %v293
    %vm300 = vmor %vm298, %vm299
    %v301 = vsel %vm300, %v293, %v297
    %v302 = vand.u32 2147483647, %v292
    %vm303 = vcmp.eq.f32.partialorder %v302, 8.507059e+37
    %v304 = vand.u32 %v292, 2147483648
    %v305 = vor.u32 1.1754944e-38, %v304
    %v306 = vsel %vm303, %v305, %v301
    %v307 = vmul.f32 1.0, %v306
    %v308 = vtanh.pop %v288
    %v310 = vrot.slane %v257, 7
    %v312 = vmul.f32 %v307, %v310
    %314 = vrot.lane.b32.xlu0 %v308, 64
    %v315 = vpop.permute.xlu0 %314
    %v317 = vmul.f32 %v307, %v315
    %319 = vrot.lane.b32.xlu0 %v317, 32
    %v320 = vpop.permute.xlu0 %319
    %v322 = vadd.f32 %v312, %v320
    %v323 = vtanh.pop %v322
    %325 = vrot.lane.b32.xlu0 %v323, 64
    %v326 = vpop.permute.xlu0 %325
    %v328 = vmul.f32 %v307, %v326
    %v329 = vpack.c.bf16 %v328, %v328
    %v331 = vshrl.u32 %v329, 16
    %v333 = vrot.slane %v331, 1
    %334 = vrot.lane.b32.xlu0 %v333, 32
    %v335 = vpop.permute.xlu0 %334
    %v337 = vsel %vm74, %v335, 0
    %339 = vmatpush.bf16.msra.mxu0 0
    %340 = vmatpush.bf16.msra.mxu0 0
    %341 = vmatpush.bf16.msra.mxu0 0
    %342 = vmatpush.bf16.msra.mxu0 0
    %343 = vmatpush.bf16.msra.mxu0 0
    %344 = vmatpush.bf16.msra.mxu0 0
    %345 = vmatpush.bf16.msra.mxu0 %v70
    %346 = vmatpush.bf16.msra.mxu0 %v69
    %347 = vmatmul.bf16.gmra.mxu0 %v337
    %v348 = vpop.f32.mrf.mxu0
    %v349 = vadd.f32 0.0, %v348
    %v350 = vpop.f32.mrf.mxu0
    %351 = vdwg.mxu0
    %v353 = vrot.slane %v349, 4
    %v355 = vadd.f32 %v64, %v353
    %v356 = vxor.u32 %v355, 2147483648
    %v357 = vmul.f32 %v356, 1.442695
    %v358 = vpow.pop %v357
    %v359 = vadd.f32 %v358, 1.0
    %v360 = vrcp.pop %v359
    %v361 = vmul.f32 %v359, %v360
    %v362 = vsub.f32 1.0, %v361
    %v363 = vmul.f32 %v360, %v362
    %v364 = vadd.f32 %v360, %v363
    %vm365 = vweird.f32 %v359
    %vm366 = vweird.f32 %v360
    %vm367 = vmor %vm365, %vm366
    %v368 = vsel %vm367, %v360, %v364
    %v369 = vand.u32 2147483647, %v359
    %vm370 = vcmp.eq.f32.partialorder %v369, 8.507059e+37
    %v371 = vand.u32 %v359, 2147483648
    %v372 = vor.u32 1.1754944e-38, %v371
    %v373 = vsel %vm370, %v372, %v368
    %v374 = vmul.f32 1.0, %v373
    %v375 = vtanh.pop %v355
    %v377 = vrot.slane %v322, 7
    %v379 = vmul.f32 %v374, %v377
    %381 = vrot.lane.b32.xlu0 %v375, 64
    %v382 = vpop.permute.xlu0 %381
    %v384 = vmul.f32 %v374, %v382
    %386 = vrot.lane.b32.xlu0 %v384, 32
    %v387 = vpop.permute.xlu0 %386
    %v389 = vadd.f32 %v379, %v387
    %v390 = vtanh.pop %v389
    %392 = vrot.lane.b32.xlu0 %v390, 64
    %v393 = vpop.permute.xlu0 %392
    %v395 = vmul.f32 %v374, %v393
    %v396 = vpack.c.bf16 %v395, %v395
    %v398 = vrot.slane %v396, 2
    %399 = vrot.lane.b32.xlu0 %v398, 32
    %v400 = vpop.permute.xlu0 %399
    %v402 = vsel %vm74, %v400, 0
    %404 = vmatpush.bf16.msra.mxu0 0
    %405 = vmatpush.bf16.msra.mxu0 0
    %406 = vmatpush.bf16.msra.mxu0 0
    %407 = vmatpush.bf16.msra.mxu0 0
    %408 = vmatpush.bf16.msra.mxu0 0
    %409 = vmatpush.bf16.msra.mxu0 0
    %410 = vmatpush.bf16.msra.mxu0 %v70
    %411 = vmatpush.bf16.msra.mxu0 %v69
    %412 = vmatmul.bf16.gmra.mxu0 %v402
    %v413 = vpop.f32.mrf.mxu0
    %v414 = vadd.f32 0.0, %v413
    %v415 = vpop.f32.mrf.mxu0
    %416 = vdwg.mxu0
    %v418 = vrot.slane %v414, 3
    %v420 = vadd.f32 %v64, %v418
    %v421 = vxor.u32 %v420, 2147483648
    %v422 = vmul.f32 %v421, 1.442695
    %v423 = vpow.pop %v422
    %v424 = vadd.f32 %v423, 1.0
    %v425 = vrcp.pop %v424
    %v426 = vmul.f32 %v424, %v425
    %v427 = vsub.f32 1.0, %v426
    %v428 = vmul.f32 %v425, %v427
    %v429 = vadd.f32 %v425, %v428
    %vm430 = vweird.f32 %v424
    %vm431 = vweird.f32 %v425
    %vm432 = vmor %vm430, %vm431
    %v433 = vsel %vm432, %v425, %v429
    %v434 = vand.u32 2147483647, %v424
    %vm435 = vcmp.eq.f32.partialorder %v434, 8.507059e+37
    %v436 = vand.u32 %v424, 2147483648
    %v437 = vor.u32 1.1754944e-38, %v436
    %v438 = vsel %vm435, %v437, %v433
    %v439 = vmul.f32 1.0, %v438
    %v440 = vtanh.pop %v420
    %v442 = vrot.slane %v389, 7
    %v444 = vmul.f32 %v439, %v442
    %446 = vrot.lane.b32.xlu0 %v440, 64
    %v447 = vpop.permute.xlu0 %446
    %v449 = vmul.f32 %v439, %v447
    %451 = vrot.lane.b32.xlu0 %v449, 32
    %v452 = vpop.permute.xlu0 %451
    %v454 = vadd.f32 %v444, %v452
    %v455 = vtanh.pop %v454
    %457 = vrot.lane.b32.xlu0 %v455, 64
    %v458 = vpop.permute.xlu0 %457
    %v460 = vmul.f32 %v439, %v458
    %v461 = vpack.c.bf16 %v460, %v460
    %v463 = vshrl.u32 %v461, 16
    %v465 = vrot.slane %v463, 2
    %466 = vrot.lane.b32.xlu0 %v465, 32
    %v467 = vpop.permute.xlu0 %466
    %v469 = vsel %vm74, %v467, 0
    %471 = vmatpush.bf16.msra.mxu0 0
    %472 = vmatpush.bf16.msra.mxu0 0
    %473 = vmatpush.bf16.msra.mxu0 0
    %474 = vmatpush.bf16.msra.mxu0 0
    %475 = vmatpush.bf16.msra.mxu0 0
    %476 = vmatpush.bf16.msra.mxu0 0
    %477 = vmatpush.bf16.msra.mxu0 %v70
    %478 = vmatpush.bf16.msra.mxu0 %v69
    %479 = vmatmul.bf16.gmra.mxu0 %v469
    %v480 = vpop.f32.mrf.mxu0
    %v481 = vadd.f32 0.0, %v480
    %v482 = vpop.f32.mrf.mxu0
    %483 = vdwg.mxu0
    %v485 = vrot.slane %v481, 2
    %v487 = vadd.f32 %v64, %v485
    %v488 = vxor.u32 %v487, 2147483648
    %v489 = vmul.f32 %v488, 1.442695
    %v490 = vpow.pop %v489
    %v491 = vadd.f32 %v490, 1.0
    %v492 = vrcp.pop %v491
    %v493 = vmul.f32 %v491, %v492
    %v494 = vsub.f32 1.0, %v493
    %v495 = vmul.f32 %v492, %v494
    %v496 = vadd.f32 %v492, %v495
    %vm497 = vweird.f32 %v491
    %vm498 = vweird.f32 %v492
    %vm499 = vmor %vm497, %vm498
    %v500 = vsel %vm499, %v492, %v496
    %v501 = vand.u32 2147483647, %v491
    %vm502 = vcmp.eq.f32.partialorder %v501, 8.507059e+37
    %v503 = vand.u32 %v491, 2147483648
    %v504 = vor.u32 1.1754944e-38, %v503
    %v505 = vsel %vm502, %v504, %v500
    %v506 = vmul.f32 1.0, %v505
    %v507 = vtanh.pop %v487
    %v509 = vrot.slane %v454, 7
    %v511 = vmul.f32 %v506, %v509
    %513 = vrot.lane.b32.xlu0 %v507, 64
    %v514 = vpop.permute.xlu0 %513
    %v516 = vmul.f32 %v506, %v514
    %518 = vrot.lane.b32.xlu0 %v516, 32
    %v519 = vpop.permute.xlu0 %518
    %v521 = vadd.f32 %v511, %v519
    %v522 = vtanh.pop %v521
    %524 = vrot.lane.b32.xlu0 %v522, 64
    %v525 = vpop.permute.xlu0 %524
    %v527 = vmul.f32 %v506, %v525
    %v528 = vpack.c.bf16 %v527, %v527
    %v530 = vrot.slane %v528, 3
    %531 = vrot.lane.b32.xlu0 %v530, 32
    %v532 = vpop.permute.xlu0 %531
    %v534 = vsel %vm74, %v532, 0
    %536 = vmatpush.bf16.msra.mxu0 0
    %537 = vmatpush.bf16.msra.mxu0 0
    %538 = vmatpush.bf16.msra.mxu0 0
    %539 = vmatpush.bf16.msra.mxu0 0
    %540 = vmatpush.bf16.msra.mxu0 0
    %541 = vmatpush.bf16.msra.mxu0 0
    %542 = vmatpush.bf16.msra.mxu0 %v70
    %543 = vmatpush.bf16.msra.mxu0 %v69
    %544 = vmatmul.bf16.gmra.mxu0 %v534
    %v545 = vpop.f32.mrf.mxu0
    %v546 = vadd.f32 0.0, %v545
    %v547 = vpop.f32.mrf.mxu0
    %548 = vdwg.mxu0
    %v550 = vrot.slane %v546, 1
    %v552 = vadd.f32 %v64, %v550
    %v553 = vxor.u32 %v552, 2147483648
    %v554 = vmul.f32 %v553, 1.442695
    %v555 = vpow.pop %v554
    %v556 = vadd.f32 %v555, 1.0
    %v557 = vrcp.pop %v556
    %v558 = vmul.f32 %v556, %v557
    %v559 = vsub.f32 1.0, %v558
    %v560 = vmul.f32 %v557, %v559
    %v561 = vadd.f32 %v557, %v560
    %vm562 = vweird.f32 %v556
    %vm563 = vweird.f32 %v557
    %vm564 = vmor %vm562, %vm563
    %v565 = vsel %vm564, %v557, %v561
    %v566 = vand.u32 2147483647, %v556
    %vm567 = vcmp.eq.f32.partialorder %v566, 8.507059e+37
    %v568 = vand.u32 %v556, 2147483648
    %v569 = vor.u32 1.1754944e-38, %v568
    %v570 = vsel %vm567, %v569, %v565
    %v571 = vmul.f32 1.0, %v570
    %v572 = vtanh.pop %v552
    %v574 = vrot.slane %v521, 7
    %v576 = vmul.f32 %v571, %v574
    %578 = vrot.lane.b32.xlu0 %v572, 64
    %v579 = vpop.permute.xlu0 %578
    %v581 = vmul.f32 %v571, %v579
    %583 = vrot.lane.b32.xlu0 %v581, 32
    %v584 = vpop.permute.xlu0 %583
    %v586 = vadd.f32 %v576, %v584
    %v587 = vtanh.pop %v586
    %589 = vrot.lane.b32.xlu0 %v587, 64
    %v590 = vpop.permute.xlu0 %589
    %v592 = vmul.f32 %v571, %v590
    %v593 = vld [vmem:[%s4] sm:$0x1]
    %v595 = vperm.slane %v593, 0
    %596 = vrot.lane.b32.xlu0 %v595, 96
    %v597 = vpop.permute.xlu0 %596
    %v599 = vmul.f32 %v592, %v597
    %601 = vrot.lane.b32.xlu0 %v599, 32
    %v602 = vpop.permute.xlu0 %601
    %vm604 = vcmask 261127
    %v605 = vsel %vm604, %v602, 0.0
    %606 = vadd.xlane.f32.xlu0 %v605
    %v607 = vpop.xlane.xlu0 %606
    %v608 = vld [vmem:[#allocation2] sm:$0x1]
    %v610 = vperm.slane %v608, 0
    %v612 = vadd.f32 %v607, %v610
    %vm613 = vcmask 7175
    %614 = vst.msk [vmem:[#allocation6 - $0x7] sm:$0x80] %vm613, %v612
    // Predicated region
    $region38: #{tpu_custom_call.1} parent=1 // pred_check
      _
    $region39: #{tpu_custom_call.1} parent=1 // pred_check_branch
      %616 = sbr.rel (0) target = $region41
    $region40: #{tpu_custom_call.1} parent=1 // pred_region
      %618 = vsyncadd [#allocation5], 0
      %s620 = sshll.u32 [#allocation6], 4
      %s621 = int_to_ptr.vmem [resolvable:$true] %s620
      %s622 = sshll.u32 %s8, 4
      %s623 = int_to_ptr.hbm [resolvable:$true] %s622
      %625 = dma.vmem_to_hbm [thread:$0]  %s621, 16, %s623, [#allocation5]
    $region41: #{tpu_custom_call.1} parent=1 // pred_fallthru
      _
    // Predicated region
    $region42: #{tpu_custom_call.1} parent=1 // pred_check
      _
    $region43: #{tpu_custom_call.1} parent=1 // pred_check_branch
      %627 = sbr.rel (0) target = $region45
    $region44: #{tpu_custom_call.1} parent=1 // pred_region
      %629 = dma.done [#allocation5], 16
    $region45: #{tpu_custom_call.1} parent=1 // pred_fallthru
      _
    %630 = vsyncpa [#allocation4], 1
    %631 = vsyncpa [#allocation5], 1

</llo_original>
